<compile_context>
chip_gen: v5e
topology: v5e:2x2
jax: 0.10.0
libtpu: 0.0.40
codegen_flags: <defaults>
</compile_context>

<pallas_src>
import functools

import jax
import jax.numpy as jnp
from jax.experimental import pallas as pl
from jax.experimental.pallas import tpu as pltpu


def _round_up(x, m):
    return ((x + m - 1) // m) * m


def _choose_tile_v(hidden, vocab, num_splits, *, target_tile_bytes=4 << 20,
                   max_tile_v=8192):
    """Pick a vocab tile so each streamed W_lm slab is a multi-MB DMA burst."""
    tv = (target_tile_bytes // (hidden * 2)) // 128 * 128
    per_split = _round_up(-(-vocab // num_splits), 128)
    tv = max(128, min(tv, per_split, max_tile_v))
    return int(tv)


def _value_head_kernel(h_ref, w_lm_ref, w_ln_ref, out_ref, acc_ref):
    """Fused LM-head + value-head over one vocab tile.

    h_ref   : (B, H)      bf16  -- last-position hidden states (resident)
    w_lm_ref: (H, tile_v) bf16  -- contiguous LM-head weight slab
    w_ln_ref: (1, tile_v) bf16  -- value-head weight tile
    out_ref : (B, 1)      f32   -- per-split partial sum (written on last tile)
    acc_ref : (B, 1)      f32   -- running accumulator across this split's tiles
    """
    j = pl.program_id(1)

    @pl.when(j == 0)
    def _():
        acc_ref[...] = jnp.zeros_like(acc_ref)

    # MXU: hidden @ W_lm tile -> logits tile, f32 accumulation.
    logits = jnp.dot(h_ref[...], w_lm_ref[...],
                     preferred_element_type=jnp.float32)
    # Match the reference where logits materialize in bf16 before the bf16
    # value-head Linear.
    logits = logits.astype(jnp.bfloat16).astype(jnp.float32)

    w = w_ln_ref[...].astype(jnp.float32)                        # (1, tile_v)
    acc_ref[...] += jnp.sum(logits * w, axis=-1, keepdims=True)  # (B, 1)

    @pl.when(j == pl.num_programs(1) - 1)
    def _():
        out_ref[...] = acc_ref[...]


def prepare_params(emb, w_lm, w_ln, b_ln, *, tile_v=None, num_splits=2):
    """One-time (offline) weight layout prep.

    w_lm (H, V) is zero-padded on the vocab axis and re-laid-out to
    (num_splits, tiles_per_split, H, tile_v) so each grid step streams one
    contiguous slab from HBM.  w_ln (1, V) is zero-padded to (1, V_pad); the
    padded columns are zero and contribute nothing to the value.
    """
    H, V = w_lm.shape
    if tile_v is None:
        tile_v = _choose_tile_v(H, V, num_splits)
    v_pad = _round_up(V, tile_v * num_splits)
    num_tiles = v_pad // tile_v
    tiles_per_split = num_tiles // num_splits

    w_lm_p = jnp.pad(w_lm, ((0, 0), (0, v_pad - V)))
    w_lm_tiled = (w_lm_p.reshape(H, num_tiles, tile_v)
                  .transpose(1, 0, 2)
                  .reshape(num_splits, tiles_per_split, H, tile_v))
    w_ln_p = jnp.pad(w_ln, ((0, 0), (0, v_pad - V)))
    return {"emb": emb, "w_lm_tiled": w_lm_tiled, "w_ln": w_ln_p, "b_ln": b_ln}


@jax.jit
def qwen_vm_forward(input_ids, attention_mask, params):
    """Forward pass of Qwen_VM.  Returns (B,) bf16 values."""
    # TODO(synk): attention_mask only affects attention inside the real Qwen
    # base model, whose transformer stack is not reproduced here.
    del attention_mask
    emb = params["emb"]                # (V_tok, H)                     bf16
    w_lm_tiled = params["w_lm_tiled"]  # (num_splits, tps, H, tile_v)   bf16
    w_ln = params["w_ln"]              # (1, V_pad)                     bf16
    b_ln = params["b_ln"]              # (1,)                           bf16

    num_splits, tiles_per_split, H, tile_v = w_lm_tiled.shape
    B = input_ids.shape[0]

    # Glue: stand-in for base_model(...)'s final hidden state at the last pos.
    hidden_last = emb[input_ids[:, -1]]                      # (B, H) bf16

    # VMEM budget: multi-buffered W_lm slabs + small resident operands, with
    # headroom; stays well inside the 64 MiB/TC physical VMEM of v7x.
    tile_bytes = H * tile_v * 2
    vmem_limit = int(min(48 << 20, max(16 << 20, 4 * tile_bytes + (4 << 20))))

    cost = pl.CostEstimate(
        flops=2 * B * H * num_splits * tiles_per_split * tile_v,
        transcendentals=0,
        bytes_accessed=(num_splits * tiles_per_split * tile_v * (H + 1) * 2
                        + B * H * 2 + num_splits * B * 4),
    )

    partials = pl.pallas_call(
        _value_head_kernel,
        out_shape=jax.ShapeDtypeStruct((num_splits, B, 1), jnp.float32),
        grid_spec=pltpu.PrefetchScalarGridSpec(
            num_scalar_prefetch=0,
            grid=(num_splits, tiles_per_split),
            in_specs=[
                # hidden: resident across the whole grid
                pl.BlockSpec((B, H), lambda c, j: (0, 0)),
                # LM-head slab: contiguous (H, tile_v) streamed per step
                pl.BlockSpec((None, None, H, tile_v),
                             lambda c, j: (c, j, 0, 0)),
                # value-head tile (contiguous lane slice)
                pl.BlockSpec((1, tile_v),
                             lambda c, j: (0, c * tiles_per_split + j)),
            ],
            out_specs=pl.BlockSpec((None, B, 1), lambda c, j: (c, 0, 0)),
            scratch_shapes=[pltpu.VMEM((B, 1), jnp.float32)],
        ),
        compiler_params=pltpu.CompilerParams(
            # outer split -> both TensorCores on v7x; inner vocab axis is the
            # reduction and must stay "arbitrary".
            dimension_semantics=("parallel", "arbitrary"),
            vmem_limit_bytes=vmem_limit,
        ),
        cost_estimate=cost,
    )(hidden_last, w_lm_tiled, w_ln)

    # Combine the per-core partial sums, add the value-head bias outside the
    # kernel (no padded (1,1) VMEM block inside), cast like the bf16 Linear.
    value = jnp.sum(partials, axis=0)[:, 0] + b_ln.astype(jnp.float32)[0]
    return value.astype(jnp.bfloat16)


def make_params(key, *, vocab_size, hidden, token_vocab):
    k_emb, k_lm, k_ln, k_b = jax.random.split(key, 4)
    emb = (jax.random.normal(k_emb, (token_vocab, hidden), jnp.float32)
           * 0.02).astype(jnp.bfloat16)
    w_lm = (jax.random.normal(k_lm, (hidden, vocab_size), jnp.float32)
            * 0.02).astype(jnp.bfloat16)
    # nn.Linear(vocab_size, 1, dtype=bf16): weight (1, vocab_size), bias (1,)
    w_ln = (jax.random.normal(k_ln, (1, vocab_size), jnp.float32)
            * (1.0 / jnp.sqrt(vocab_size))).astype(jnp.bfloat16)
    b_ln = (jax.random.normal(k_b, (1,), jnp.float32) * 0.01).astype(jnp.bfloat16)
    return emb, w_lm, w_ln, b_ln


if __name__ == "__main__":
    # Small shapes consistent with the module: batch=2, seq=8, hidden=32,
    # vocab=2048 (stands in for 152064).
    B, S, H, V = 2, 8, 32, 2048
    TOKEN_VOCAB = 256

    key = jax.random.PRNGKey(0)
    k_ids, k_params = jax.random.split(key)

    input_ids = jax.random.randint(k_ids, (B, S), 0, TOKEN_VOCAB, dtype=jnp.int32)
    attention_mask = jnp.ones((B, S), dtype=jnp.int32)

    emb, w_lm, w_ln, b_ln = make_params(k_params, vocab_size=V, hidden=H,
                                        token_vocab=TOKEN_VOCAB)
    params = prepare_params(emb, w_lm, w_ln, b_ln, num_splits=2)

    values = qwen_vm_forward(input_ids, attention_mask, params)
    jax.block_until_ready(values)

    # Reference check in plain JAX (same math on the un-tiled weights).
    hidden_last = emb[input_ids[:, -1]]
    logits = jnp.dot(hidden_last.astype(jnp.float32),
                     w_lm.astype(jnp.float32)).astype(jnp.bfloat16)
    ref = (jnp.sum(logits.astype(jnp.float32) * w_ln.astype(jnp.float32),
                   axis=-1)
           + b_ln.astype(jnp.float32)[0]).astype(jnp.bfloat16)

    assert values.shape == (B,) and values.dtype == jnp.bfloat16
    assert jnp.allclose(values.astype(jnp.float32), ref.astype(jnp.float32),
                        rtol=2e-2, atol=2e-2)

    print("KERNEL_OK")
</pallas_src>

<mosaic_0001>
module attributes {stable_mosaic.version = 11 : i64} {
  func.func @_value_head_kernel(%arg0: i32, %arg1: i32, %arg2: memref<2x32xbf16, #tpu.memory_space<vmem>>, %arg3: memref<1x1x32x1024xbf16, #tpu.memory_space<vmem>>, %arg4: memref<1x1024xbf16, #tpu.memory_space<vmem>>, %arg5: memref<1x2x1xf32, #tpu.memory_space<vmem>>, %arg6: memref<2x1xf32, #tpu.memory_space<vmem>>) attributes {dimension_semantics = [#tpu.dimension_semantics<parallel>, #tpu.dimension_semantics<arbitrary>], iteration_bounds = array<i64: 2, 1>, scalar_prefetch = 0 : i64, scratch_operands = 1 : i64, tpu.core_type = #tpu.core_type<tc>, window_params = [{pipeline_mode = #tpu.pipeline_mode<synchronous>, transform_indices = @transform_0, window_bounds = array<i64: 2, 32>}, {transform_indices = @transform_1, window_bounds = array<i64: 1, 1, 32, 1024>}, {transform_indices = @transform_2, window_bounds = array<i64: 1, 1024>}, {transform_indices = @transform_3, window_bounds = array<i64: 1, 2, 1>}]} {
    %c0_i32 = arith.constant 0 : i32
    %0 = arith.cmpi eq, %arg1, %c0_i32 : i32
    %1 = arith.extui %0 : i1 to i32
    %c0_i32_0 = arith.constant 0 : i32
    %2 = arith.cmpi ne, %1, %c0_i32_0 : i32
    scf.if %2 {
      %cst_15 = arith.constant 0.000000e+00 : f32
      %21 = vector.broadcast %cst_15 : f32 to vector<2x1xf32>
      %c0_16 = arith.constant 0 : index
      %c0_17 = arith.constant 0 : index
      %22 = vector.load %arg6[%c0_16, %c0_17] : memref<2x1xf32, #tpu.memory_space<vmem>>, vector<2x1xf32>
      tpu.vector_store %arg6[%c0_16, %c0_17], %21 {strides = array<i32>} : memref<2x1xf32, #tpu.memory_space<vmem>>, vector<2x1xf32>,
    } else {
    }
    %c0 = arith.constant 0 : index
    %c0_1 = arith.constant 0 : index
    %3 = vector.load %arg2[%c0, %c0_1] : memref<2x32xbf16, #tpu.memory_space<vmem>>, vector<2x32xbf16>
    %c0_2 = arith.constant 0 : index
    %c0_3 = arith.constant 0 : index
    %c0_4 = arith.constant 0 : index
    %c0_5 = arith.constant 0 : index
    %4 = vector.load %arg3[%c0_2, %c0_3, %c0_4, %c0_5] : memref<1x1x32x1024xbf16, #tpu.memory_space<vmem>>, vector<1x1x32x1024xbf16>
    %5 = vector.shape_cast %4 : vector<1x1x32x1024xbf16> to vector<32x1024xbf16>
    %cst = arith.constant dense<0.000000e+00> : vector<2x1024xf32>
    %6 = tpu.matmul %3, %5, %cst {dimension_numbers = #tpu.dot_dimension_numbers<[1], [0], [0], [1], [0, 0, 1, 1], [], []>} : vector<2x32xbf16>, vector<32x1024xbf16>, vector<2x1024xf32> -> vector<2x1024xf32>
    %7 = arith.truncf %6 : vector<2x1024xf32> to vector<2x1024xbf16>
    %8 = arith.extf %7 : vector<2x1024xbf16> to vector<2x1024xf32>
    %c0_6 = arith.constant 0 : index
    %c0_7 = arith.constant 0 : index
    %9 = vector.load %arg4[%c0_6, %c0_7] : memref<1x1024xbf16, #tpu.memory_space<vmem>>, vector<1x1024xbf16>
    %10 = arith.extf %9 : vector<1x1024xbf16> to vector<1x1024xf32>
    %c0_8 = arith.constant 0 : index
    %c0_9 = arith.constant 0 : index
    %11 = vector.load %arg6[%c0_8, %c0_9] : memref<2x1xf32, #tpu.memory_space<vmem>>, vector<2x1xf32>
    %12 = vector.broadcast %10 : vector<1x1024xf32> to vector<2x1024xf32>
    %13 = arith.mulf %8, %12 : vector<2x1024xf32>
    %cst_10 = arith.constant dense<0.000000e+00> : vector<2xf32>
    %14 = vector.multi_reduction <add>, %13, %cst_10 [1] : vector<2x1024xf32> to vector<2xf32>
    %15 = vector.shape_cast %14 : vector<2xf32> to vector<2x1xf32>
    %16 = arith.addf %11, %15 : vector<2x1xf32>
    %c0_11 = arith.constant 0 : index
    %c0_12 = arith.constant 0 : index
    %17 = vector.load %arg6[%c0_11, %c0_12] : memref<2x1xf32, #tpu.memory_space<vmem>>, vector<2x1xf32>
    tpu.vector_store %arg6[%c0_11, %c0_12], %16 {strides = array<i32>} : memref<2x1xf32, #tpu.memory_space<vmem>>, vector<2x1xf32>,
    %c0_i32_13 = arith.constant 0 : i32
    %18 = arith.cmpi eq, %arg1, %c0_i32_13 : i32
    %19 = arith.extui %18 : i1 to i32
    %c0_i32_14 = arith.constant 0 : i32
    %20 = arith.cmpi ne, %19, %c0_i32_14 : i32
    scf.if %20 {
      %c0_15 = arith.constant 0 : index
      %c0_16 = arith.constant 0 : index
      %21 = vector.load %arg6[%c0_15, %c0_16] : memref<2x1xf32, #tpu.memory_space<vmem>>, vector<2x1xf32>
      %c0_17 = arith.constant 0 : index
      %c0_18 = arith.constant 0 : index
      %c0_19 = arith.constant 0 : index
      %22 = vector.load %arg5[%c0_17, %c0_18, %c0_19] : memref<1x2x1xf32, #tpu.memory_space<vmem>>, vector<1x2x1xf32>
      %23 = vector.shape_cast %22 : vector<1x2x1xf32> to vector<2x1xf32>
      %24 = vector.shape_cast %21 : vector<2x1xf32> to vector<1x2x1xf32>
      tpu.vector_store %arg5[%c0_17, %c0_18, %c0_19], %24 {strides = array<i32>} : memref<1x2x1xf32, #tpu.memory_space<vmem>>, vector<1x2x1xf32>,
    } else {
    }
    return
  }
  func.func @transform_0(%arg0: i32, %arg1: i32) -> (i32, i32) {
    %c0_i32 = arith.constant 0 : i32
    %c0_i32_0 = arith.constant 0 : i32
    %c0_i32_1 = arith.constant 0 : i32
    return %c0_i32, %c0_i32_0 : i32, i32
  }
  func.func @transform_1(%arg0: i32, %arg1: i32) -> (i32, i32, i32, i32) {
    %c0_i32 = arith.constant 0 : i32
    %c0_i32_0 = arith.constant 0 : i32
    %c0_i32_1 = arith.constant 0 : i32
    return %arg0, %arg1, %c0_i32, %c0_i32_0 : i32, i32, i32, i32
  }
  func.func @transform_2(%arg0: i32, %arg1: i32) -> (i32, i32) {
    %c1_i32 = arith.constant 1 : i32
    %0 = arith.muli %arg0, %c1_i32 : i32
    %1 = arith.addi %0, %arg1 : i32
    %c0_i32 = arith.constant 0 : i32
    %c0_i32_0 = arith.constant 0 : i32
    return %c0_i32, %1 : i32, i32
  }
  func.func @transform_3(%arg0: i32, %arg1: i32) -> (i32, i32, i32) {
    %c0_i32 = arith.constant 0 : i32
    %c0_i32_0 = arith.constant 0 : i32
    %c0_i32_1 = arith.constant 0 : i32
    return %arg0, %c0_i32, %c0_i32_0 : i32, i32, i32
  }
}

</mosaic_0001>

<llo_original>
// kernel: qwen_vm_forward.1
$region0: #{qwen_vm_forward.1}
  #allocation0 [shape = 'u32[]', space=smem, size = 0x4, offset = 0x4, fixed_abs, tag = 'smem constant byte address 0x4 - core index']
  #allocation1 [shape = 'u32[72,128]{1,0:T(1,128)}', space=vmem, size = 0x9000, scoped, tag = 'internal scratch']
  #allocation2 [shape = 'f32[2,1]{1,0:T(2,128)}', space=vmem, size = 0x400, scoped, tag = 'scratch operand']
  %s0 = inlined_call_operand.vmem [shape: bf16[2,32], index: 0, kind: input, shape index: {}]
  %s1 = inlined_call_operand.hbm [shape: bf16[2,1,32,1024], index: 1, kind: input, shape index: {}]
  %s2 = inlined_call_operand.vmem [shape: bf16[1,2048], index: 2, kind: input, shape index: {}]
  %s3 = inlined_call_operand.vmem [shape: f32[2,2,1], index: 3, kind: output, shape index: {}]
  %s4 = sld [smem:[#allocation0]]
  $region57: #{qwen_vm_forward.1} parent=0
    _
  %s6 = ssub.s32 1, %s4
  %s7 = scalar_select 0, %s6, %s4
  $region1: #{qwen_vm_forward.1} parent=0
    #allocation3 [shape = 'u8[131072]{0}', space=vmem, size = 0x20000, scoped, tag = 'input window, operand 1']
    #allocation4 [shape = 's32[2]{0}', space=sflag, size = 0x8, scoped, tag = 'scoped memory for qwen_vm_forward.1']
    %8 = vsyncpa [#allocation4], 0
    %s9 = scalar_lea.sflag [#allocation4], 1
    %10 = vsyncpa %s9, 0
    loop: start=0, step=1, limit=4
    $region2: #{qwen_vm_forward.1} parent=1 // loop_pre_header
      _
    $region3: #{qwen_vm_forward.1} parent=1 // loop_header
      %s12 = sphi 0, %s16
      %p13 = scmp.ge.s32.totalorder %s12, 4
      %s19 = sphi 0, %s31
      %s20 = sphi 0, %s27
      %s21 = sphi 0, %s19
      %s22 = sphi 0, %s20
      %s23 = sphi 0, %s21
      %s24 = sphi 0, %s22
      %s32 = sphi 0, %s32
      %s34 = sphi 0, %s32
      %s35 = sphi 0, %s34
      %s49 = sphi 0, %s35
      %s57 = sphi 0, %s59
      %s60 = sphi 0, %s57
      %s61 = sphi 0, %s60
      %s77 = sphi 0, %s61
      %s85 = sphi 0, %s87
      %s88 = sphi 0, %s85
      %s89 = sphi 0, %s88
      %s105 = sphi 0, %s89
      %s111 = sphi 0, %s113
      %s114 = sphi 0, %s111
      %s115 = sphi 0, %s114
      %s131 = sphi 0, %s115
    $region4: #{qwen_vm_forward.1} parent=1 // loop_header_branch
      %15 = sbr.rel (%p13) target = $region8
    $region5: #{qwen_vm_forward.1} parent=1 // loop_body
      %s17 = ssub.s32 %s12, 1
      %s18 = ssub.s32 %s12, 2
      %s25 = sadd.s32 1, %s20
      %p26 = scmp.ge.s32.totalorder %s25, 1
      %s27 = scalar_select %p26, 0, %s25
      %s28 = sadd.s32 1, %s19
      %s29 = scalar_select %p26, %s28, %s19
      %p30 = scmp.ge.s32.totalorder %s29, 2
      %s31 = scalar_select %p30, 0, %s29
      %s33 = sadd.s32 %s32, 1
      %p36 = scmp.eq.s32.totalorder %s12, 1
      %p37 = scmp.ne.s32.totalorder %s32, %s34
      %p38 = scmp.eq.s32.totalorder %s12, 0
      %p39 = por %p37, %p38
      %p40 = scmp.ne.s32.totalorder %s32, %s34
      %p41 = scmp.eq.s32.totalorder %s17, 1
      %p42 = por %p40, %p41
      %p43 = scmp.ne.s32.totalorder %s34, %s35
      %p44 = scmp.eq.s32.totalorder %s17, 0
      %p45 = por %p43, %p44
      %p46 = scmp.ne.s32.totalorder %s34, %s35
      %p47 = scmp.eq.s32.totalorder %s18, 1
      %p48 = por %p46, %p47
      %p50 = scmp.ne.s32.totalorder %s35, %s49
      %p51 = scmp.eq.s32.totalorder %s18, 0
      %p52 = por %p50, %p51
      %s53 = ssub.s32 %s19, %s31
      %s54 = ssub.s32 %s20, %s27
      %s55 = sor.u32 %s53, %s54
      %p56 = scmp.eq.s32.totalorder %s55, 0
      %s58 = sadd.s32 %s57, 1
      %s59 = scalar_select %p56, %s57, %s58
      %p62 = pneg %p56
      %p63 = scmp.eq.s32.totalorder %s12, 1
      %p64 = por %p62, %p63
      %p65 = scmp.ne.s32.totalorder %s57, %s60
      %p66 = scmp.eq.s32.totalorder %s12, 0
      %p67 = por %p65, %p66
      %p68 = scmp.ne.s32.totalorder %s57, %s60
      %p69 = scmp.eq.s32.totalorder %s17, 1
      %p70 = por %p68, %p69
      %p71 = scmp.ne.s32.totalorder %s60, %s61
      %p72 = scmp.eq.s32.totalorder %s17, 0
      %p73 = por %p71, %p72
      %p74 = scmp.ne.s32.totalorder %s60, %s61
      %p75 = scmp.eq.s32.totalorder %s18, 1
      %p76 = por %p74, %p75
      %p78 = scmp.ne.s32.totalorder %s61, %s77
      %p79 = scmp.eq.s32.totalorder %s18, 0
      %p80 = por %p78, %p79
      %s81 = sadd.s32 %s19, %s20
      %s82 = sadd.s32 %s31, %s27
      %s83 = ssub.s32 %s81, %s82
      %p84 = scmp.eq.s32.totalorder %s83, 0
      %s86 = sadd.s32 %s85, 1
      %s87 = scalar_select %p84, %s85, %s86
      %p90 = pneg %p84
      %p91 = scmp.eq.s32.totalorder %s12, 1
      %p92 = por %p90, %p91
      %p93 = scmp.ne.s32.totalorder %s85, %s88
      %p94 = scmp.eq.s32.totalorder %s12, 0
      %p95 = por %p93, %p94
      %p96 = scmp.ne.s32.totalorder %s85, %s88
      %p97 = scmp.eq.s32.totalorder %s17, 1
      %p98 = por %p96, %p97
      %p99 = scmp.ne.s32.totalorder %s88, %s89
      %p100 = scmp.eq.s32.totalorder %s17, 0
      %p101 = por %p99, %p100
      %p102 = scmp.ne.s32.totalorder %s88, %s89
      %p103 = scmp.eq.s32.totalorder %s18, 1
      %p104 = por %p102, %p103
      %p106 = scmp.ne.s32.totalorder %s89, %s105
      %p107 = scmp.eq.s32.totalorder %s18, 0
      %p108 = por %p106, %p107
      %s109 = ssub.s32 %s19, %s31
      %p110 = scmp.eq.s32.totalorder %s109, 0
      %s112 = sadd.s32 %s111, 1
      %s113 = scalar_select %p110, %s111, %s112
      %p116 = pneg %p110
      %p117 = scmp.eq.s32.totalorder %s12, 1
      %p118 = por %p116, %p117
      %p119 = scmp.ne.s32.totalorder %s111, %s114
      %p120 = scmp.eq.s32.totalorder %s12, 0
      %p121 = por %p119, %p120
      %p122 = scmp.ne.s32.totalorder %s111, %s114
      %p123 = scmp.eq.s32.totalorder %s17, 1
      %p124 = por %p122, %p123
      %p125 = scmp.ne.s32.totalorder %s114, %s115
      %p126 = scmp.eq.s32.totalorder %s17, 0
      %p127 = por %p125, %p126
      %p128 = scmp.ne.s32.totalorder %s114, %s115
      %p129 = scmp.eq.s32.totalorder %s18, 1
      %p130 = por %p128, %p129
      %p132 = scmp.ne.s32.totalorder %s115, %s131
      %p133 = scmp.eq.s32.totalorder %s18, 0
      %p134 = por %p132, %p133
      %p135 = scmp.le.s32.totalorder 1, %s12
      %p136 = scmp.lt.s32.totalorder %s12, 3
      %p137 = pnand %p135, %p136
      %p138 = pneg %p137
      // Predicated region
      $region9: #{qwen_vm_forward.1} parent=5 // pred_check
        _
      $region10: #{qwen_vm_forward.1} parent=5 // pred_check_branch
        %140 = sbr.rel (%p137) target = $region12
      $region11: #{qwen_vm_forward.1} parent=5 // pred_region
        %s141 = ssub.s32 %s12, 1
        // Predicated region
        $region13: #{qwen_vm_forward.1} parent=11 // pred_check
          %p142 = pneg %p45
        $region14: #{qwen_vm_forward.1} parent=11 // pred_check_branch
          %144 = sbr.rel (%p142) target = $region16
        $region15: #{qwen_vm_forward.1} parent=11 // pred_region
          _
        $region16: #{qwen_vm_forward.1} parent=11 // pred_fallthru
          _
      $region12: #{qwen_vm_forward.1} parent=5 // pred_fallthru
        _
      %p145 = scmp.lt.s32.totalorder %s12, 2
      // Predicated region
      $region17: #{qwen_vm_forward.1} parent=5 // pred_check
        %p146 = pneg %p145
      $region18: #{qwen_vm_forward.1} parent=5 // pred_check_branch
        %148 = sbr.rel (%p146) target = $region20
      $region19: #{qwen_vm_forward.1} parent=5 // pred_region
        // Predicated region
        $region21: #{qwen_vm_forward.1} parent=19 // pred_check
          %p149 = pneg %p67
        $region22: #{qwen_vm_forward.1} parent=19 // pred_check_branch
          %151 = sbr.rel (%p149) target = $region24
        $region23: #{qwen_vm_forward.1} parent=19 // pred_region
          %s152 = sand.u32 %s57, 1
          %s153 = scalar_lea.sflag [#allocation4], %s152
          %s154 = sand.u32 %s57, 1
          %s155 = smul.addr %s154, 128
          %s156 = scalar_lea.vmem [#allocation3], %s155
          %158 = vsyncadd %s153, 0
          %s159 = smul.addr %s20, 32
          %s160 = smul.addr %s19, 32
          %s161 = sadd.s32 %s159, %s160
          %s162 = smul.addr %s161, 4
          %s163 = scalar_lea.hbm %s1, %s162
          %s164 = sshll.u32 %s163, 4
          %s165 = int_to_ptr.hbm [resolvable:$true] %s164
          %s166 = sshll.u32 %s156, 4
          %s167 = int_to_ptr.vmem [resolvable:$true] %s166
          %172 = dma.hbm_to_vmem [thread:$0]  %s165, 2048, %s167, %s153, 512, 512, 32
        $region24: #{qwen_vm_forward.1} parent=19 // pred_fallthru
          _
        // Predicated region
        $region25: #{qwen_vm_forward.1} parent=19 // pred_check
          %p173 = pneg %p95
        $region26: #{qwen_vm_forward.1} parent=19 // pred_check_branch
          %175 = sbr.rel (%p173) target = $region28
        $region27: #{qwen_vm_forward.1} parent=19 // pred_region
          %s176 = sadd.s32 %s19, %s20
          %s177 = smul.u32 8, %s176
          %p178 = scmp.lt.s32.totalorder %s177, 15
          %s179 = scalar_select %p178, %s177, 15
          %s180 = scalar_lea.vmem %s2, %s179
          %s181 = sadd.s32 %s19, %s20
          %s182 = smul.u32 8, %s181
        $region28: #{qwen_vm_forward.1} parent=19 // pred_fallthru
          _
      $region20: #{qwen_vm_forward.1} parent=5 // pred_fallthru
        _
      %p183 = scmp.le.s32.totalorder 1, %s12
      %p184 = scmp.lt.s32.totalorder %s12, 3
      %p185 = pnand %p183, %p184
      %p186 = pneg %p185
      // Predicated region
      $region29: #{qwen_vm_forward.1} parent=5 // pred_check
        _
      $region30: #{qwen_vm_forward.1} parent=5 // pred_check_branch
        %188 = sbr.rel (%p185) target = $region32
      $region31: #{qwen_vm_forward.1} parent=5 // pred_region
        %s189 = ssub.s32 %s12, 1
        %s190 = sand.u32 %s60, 1
        %s191 = scalar_lea.sflag [#allocation4], %s190
        %s192 = sand.u32 %s60, 1
        %s193 = smul.addr %s192, 128
        %s194 = scalar_lea.vmem [#allocation3], %s193
        // Predicated region
        $region33: #{qwen_vm_forward.1} parent=31 // pred_check
          %p195 = pneg %p73
        $region34: #{qwen_vm_forward.1} parent=31 // pred_check_branch
          %197 = sbr.rel (%p195) target = $region36
        $region35: #{qwen_vm_forward.1} parent=31 // pred_region
          %199 = dma.done %s191, 2048
        $region36: #{qwen_vm_forward.1} parent=31 // pred_fallthru
          _
        %p200 = pneg %p45
        %p201 = pneg %p42
        %s202 = sand.u32 %s60, 1
        %s203 = scalar_lea.sflag [#allocation4], %s202
        %s204 = sand.u32 %s60, 1
        %s205 = smul.addr %s204, 128
        %s206 = scalar_lea.vmem [#allocation3], %s205
        %p207 = pneg %p73
        %p208 = pneg %p70
        %s209 = sadd.s32 %s21, %s22
        %s210 = smul.u32 8, %s209
        %p211 = scmp.lt.s32.totalorder %s210, 15
        %s212 = scalar_select %p211, %s210, 15
        %s213 = scalar_lea.vmem %s2, %s212
        %p214 = pneg %p101
        %p215 = pneg %p98
        %p216 = pneg %p127
        %p217 = pneg %p124
        %p218 = scmp.lt.s32.totalorder %s21, 1
        %s219 = scalar_select %p218, %s21, 1
        %s220 = smul.addr %s219, 2
        %s221 = scalar_lea.vmem %s3, %s220
        %s222 = sadd.s32 %s21, %s22
        %s223 = smul.u32 8, %s222
        %p224 = scmp.lt.s32.totalorder %s223, 15
        %s225 = scalar_select %p224, %s223, 15
        %s226 = scalar_lea.vmem %s2, %s225
        %s227 = sadd.s32 %s21, %s22
        %s228 = smul.u32 8, %s227
        %p229 = scmp.lt.s32.totalorder %s21, 1
        %s230 = scalar_select %p229, %s21, 1
        %s231 = smul.addr %s230, 2
        %s232 = scalar_lea.vmem %s3, %s231
        %p234 = scmp.eq.s32.totalorder %s22, 0
        // Predicated region
        $region37: #{qwen_vm_forward.1} parent=31 // pred_check
          %p235 = pneg %p234
        $region38: #{qwen_vm_forward.1} parent=31 // pred_check_branch
          %237 = sbr.rel (%p235) target = $region40
        $region39: #{qwen_vm_forward.1} parent=31 // pred_region
          %vm238 = vcmask 1024
          %239 = vst.msk [vmem:[#allocation2] sm:$0x3] %vm238, 0.0
        $region40: #{qwen_vm_forward.1} parent=31 // pred_fallthru
          _
        %v240 = vld [vmem:[%s0] sm:$0x1]
        %v241 = vld [vmem:[%s194] sm:$0xff]
        %v242 = vld [vmem:[%s194 + $0x8] sm:$0xff]
        %v243 = vld [vmem:[%s194 + $0x10] sm:$0xff]
        %v244 = vld [vmem:[%s194 + $0x18] sm:$0xff]
        %v245 = vld [vmem:[%s194 + $0x20] sm:$0xff]
        %v246 = vld [vmem:[%s194 + $0x28] sm:$0xff]
        %v247 = vld [vmem:[%s194 + $0x30] sm:$0xff]
        %v248 = vld [vmem:[%s194 + $0x38] sm:$0xff]
        %v249 = vld [vmem:[%s194 + $0x40] sm:$0xff]
        %v250 = vld [vmem:[%s194 + $0x48] sm:$0xff]
        %v251 = vld [vmem:[%s194 + $0x50] sm:$0xff]
        %v252 = vld [vmem:[%s194 + $0x58] sm:$0xff]
        %v253 = vld [vmem:[%s194 + $0x60] sm:$0xff]
        %v254 = vld [vmem:[%s194 + $0x68] sm:$0xff]
        %v255 = vld [vmem:[%s194 + $0x70] sm:$0xff]
        %v256 = vld [vmem:[%s194 + $0x78] sm:$0xff]
        %v273 = vunpack.c.l.b16 %v241
        %v274 = vunpack.c.h.b16 %v241
        %v275 = vunpack.c.l.b16 %v242
        %v276 = vunpack.c.h.b16 %v242
        %v277 = vunpack.c.l.b16 %v243
        %v278 = vunpack.c.h.b16 %v243
        %v279 = vunpack.c.l.b16 %v244
        %v280 = vunpack.c.h.b16 %v244
        %v281 = vunpack.c.l.b16 %v245
        %v282 = vunpack.c.h.b16 %v245
        %v283 = vunpack.c.l.b16 %v246
        %v284 = vunpack.c.h.b16 %v246
        %v285 = vunpack.c.l.b16 %v247
        %v286 = vunpack.c.h.b16 %v247
        %v287 = vunpack.c.l.b16 %v248
        %v288 = vunpack.c.h.b16 %v248
        %v289 = vunpack.c.l.b16 %v249
        %v290 = vunpack.c.h.b16 %v249
        %v291 = vunpack.c.l.b16 %v250
        %v292 = vunpack.c.h.b16 %v250
        %v293 = vunpack.c.l.b16 %v251
        %v294 = vunpack.c.h.b16 %v251
        %v295 = vunpack.c.l.b16 %v252
        %v296 = vunpack.c.h.b16 %v252
        %v297 = vunpack.c.l.b16 %v253
        %v298 = vunpack.c.h.b16 %v253
        %v299 = vunpack.c.l.b16 %v254
        %v300 = vunpack.c.h.b16 %v254
        %v301 = vunpack.c.l.b16 %v255
        %v302 = vunpack.c.h.b16 %v255
        %v303 = vunpack.c.l.b16 %v256
        %v304 = vunpack.c.h.b16 %v256
        %v305 = vpack.c.b16 %v281, %v273
        %v306 = vpack.c.b16 %v282, %v274
        %v307 = vpack.c.b16 %v283, %v275
        %v308 = vpack.c.b16 %v284, %v276
        %v309 = vpack.c.b16 %v285, %v277
        %v310 = vpack.c.b16 %v286, %v278
        %v311 = vpack.c.b16 %v287, %v279
        %v312 = vpack.c.b16 %v288, %v280
        %v313 = vpack.c.b16 %v297, %v289
        %v314 = vpack.c.b16 %v298, %v290
        %v315 = vpack.c.b16 %v299, %v291
        %v316 = vpack.c.b16 %v300, %v292
        %v317 = vpack.c.b16 %v301, %v293
        %v318 = vpack.c.b16 %v302, %v294
        %v319 = vpack.c.b16 %v303, %v295
        %v320 = vpack.c.b16 %v304, %v296
        %vm337 = vcmask 261120
        %v339 = vsel %vm337, %v240, 0
        %341 = vmatpush.bf16.msra.mxu0 0
        %342 = vmatpush.bf16.msra.mxu0 0
        %343 = vmatpush.bf16.msra.mxu0 0
        %344 = vmatpush.bf16.msra.mxu0 0
        %345 = vmatpush.bf16.msra.mxu0 0
        %346 = vmatpush.bf16.msra.mxu0 0
        %347 = vmatpush.bf16.msra.mxu0 %v313
        %348 = vmatpush.bf16.msra.mxu0 %v305
        %349 = vmatmul.bf16.gmra.mxu0 %v339
        %v350 = vpop.f32.mrf.mxu0
        %v351 = vadd.f32 0.0, %v350
        %v352 = vpop.f32.mrf.mxu0
        %353 = vdwg.mxu0
        %354 = vmatpush.bf16.msra.mxu0 0
        %355 = vmatpush.bf16.msra.mxu0 0
        %356 = vmatpush.bf16.msra.mxu0 0
        %357 = vmatpush.bf16.msra.mxu0 0
        %358 = vmatpush.bf16.msra.mxu0 0
        %359 = vmatpush.bf16.msra.mxu0 0
        %360 = vmatpush.bf16.msra.mxu0 %v314
        %361 = vmatpush.bf16.msra.mxu0 %v306
        %362 = vmatmul.bf16.gmra.mxu0 %v339
        %v363 = vpop.f32.mrf.mxu0
        %v364 = vadd.f32 0.0, %v363
        %v365 = vpop.f32.mrf.mxu0
        %366 = vdwg.mxu0
        %367 = vmatpush.bf16.msra.mxu0 0
        %368 = vmatpush.bf16.msra.mxu0 0
        %369 = vmatpush.bf16.msra.mxu0 0
        %370 = vmatpush.bf16.msra.mxu0 0
        %371 = vmatpush.bf16.msra.mxu0 0
        %372 = vmatpush.bf16.msra.mxu0 0
        %373 = vmatpush.bf16.msra.mxu0 %v315
        %374 = vmatpush.bf16.msra.mxu0 %v307
        %375 = vmatmul.bf16.gmra.mxu0 %v339
        %v376 = vpop.f32.mrf.mxu0
        %v377 = vadd.f32 0.0, %v376
        %v378 = vpop.f32.mrf.mxu0
        %379 = vdwg.mxu0
        %380 = vmatpush.bf16.msra.mxu0 0
        %381 = vmatpush.bf16.msra.mxu0 0
        %382 = vmatpush.bf16.msra.mxu0 0
        %383 = vmatpush.bf16.msra.mxu0 0
        %384 = vmatpush.bf16.msra.mxu0 0
        %385 = vmatpush.bf16.msra.mxu0 0
        %386 = vmatpush.bf16.msra.mxu0 %v316
        %387 = vmatpush.bf16.msra.mxu0 %v308
        %388 = vmatmul.bf16.gmra.mxu0 %v339
        %v389 = vpop.f32.mrf.mxu0
        %v390 = vadd.f32 0.0, %v389
        %v391 = vpop.f32.mrf.mxu0
        %392 = vdwg.mxu0
        %393 = vmatpush.bf16.msra.mxu0 0
        %394 = vmatpush.bf16.msra.mxu0 0
        %395 = vmatpush.bf16.msra.mxu0 0
        %396 = vmatpush.bf16.msra.mxu0 0
        %397 = vmatpush.bf16.msra.mxu0 0
        %398 = vmatpush.bf16.msra.mxu0 0
        %399 = vmatpush.bf16.msra.mxu0 %v317
        %400 = vmatpush.bf16.msra.mxu0 %v309
        %401 = vmatmul.bf16.gmra.mxu0 %v339
        %v402 = vpop.f32.mrf.mxu0
        %v403 = vadd.f32 0.0, %v402
        %v404 = vpop.f32.mrf.mxu0
        %405 = vdwg.mxu0
        %406 = vmatpush.bf16.msra.mxu0 0
        %407 = vmatpush.bf16.msra.mxu0 0
        %408 = vmatpush.bf16.msra.mxu0 0
        %409 = vmatpush.bf16.msra.mxu0 0
        %410 = vmatpush.bf16.msra.mxu0 0
        %411 = vmatpush.bf16.msra.mxu0 0
        %412 = vmatpush.bf16.msra.mxu0 %v318
        %413 = vmatpush.bf16.msra.mxu0 %v310
        %414 = vmatmul.bf16.gmra.mxu0 %v339
        %v415 = vpop.f32.mrf.mxu0
        %v416 = vadd.f32 0.0, %v415
        %v417 = vpop.f32.mrf.mxu0
        %418 = vdwg.mxu0
        %419 = vmatpush.bf16.msra.mxu0 0
        %420 = vmatpush.bf16.msra.mxu0 0
        %421 = vmatpush.bf16.msra.mxu0 0
        %422 = vmatpush.bf16.msra.mxu0 0
        %423 = vmatpush.bf16.msra.mxu0 0
        %424 = vmatpush.bf16.msra.mxu0 0
        %425 = vmatpush.bf16.msra.mxu0 %v319
        %426 = vmatpush.bf16.msra.mxu0 %v311
        %427 = vmatmul.bf16.gmra.mxu0 %v339
        %v428 = vpop.f32.mrf.mxu0
        %v429 = vadd.f32 0.0, %v428
        %v430 = vpop.f32.mrf.mxu0
        %431 = vdwg.mxu0
        %432 = vmatpush.bf16.msra.mxu0 0
        %433 = vmatpush.bf16.msra.mxu0 0
        %434 = vmatpush.bf16.msra.mxu0 0
        %435 = vmatpush.bf16.msra.mxu0 0
        %436 = vmatpush.bf16.msra.mxu0 0
        %437 = vmatpush.bf16.msra.mxu0 0
        %438 = vmatpush.bf16.msra.mxu0 %v320
        %439 = vmatpush.bf16.msra.mxu0 %v312
        %440 = vmatmul.bf16.gmra.mxu0 %v339
        %v441 = vpop.f32.mrf.mxu0
        %v442 = vadd.f32 0.0, %v441
        %v443 = vpop.f32.mrf.mxu0
        %444 = vdwg.mxu0
        %v445 = vpack.c.bf16 %v364, %v351
        %v446 = vpack.c.bf16 %v390, %v377
        %v447 = vpack.c.bf16 %v416, %v403
        %v448 = vpack.c.bf16 %v442, %v429
        %v449 = vunpack.c.l.bf16 %v445
        %v450 = vunpack.c.h.bf16 %v445
        %v451 = vunpack.c.l.bf16 %v446
        %v452 = vunpack.c.h.bf16 %v446
        %v453 = vunpack.c.l.bf16 %v447
        %v454 = vunpack.c.h.bf16 %v447
        %v455 = vunpack.c.l.bf16 %v448
        %v456 = vunpack.c.h.bf16 %v448
        %v457 = vld [vmem:[%s226] sm:$0xff]
        %v458 = vunpack.c.l.bf16 %v457
        %v459 = vunpack.c.h.bf16 %v457
        %v460 = vld [vmem:[#allocation2] sm:$0x3]
        %v463 = vperm.slane %v458, 0
        %v464 = vperm.slane %v458, 2
        %v465 = vperm.slane %v458, 4
        %v466 = vperm.slane %v458, 6
        %v467 = vperm.slane %v459, 0
        %v468 = vperm.slane %v459, 2
        %v469 = vperm.slane %v459, 4
        %v470 = vperm.slane %v459, 6
        %v479 = vperm.slane %v463, 0
        %v480 = vperm.slane %v464, 0
        %v481 = vperm.slane %v465, 0
        %v482 = vperm.slane %v466, 0
        %v483 = vperm.slane %v467, 0
        %v484 = vperm.slane %v468, 0
        %v485 = vperm.slane %v469, 0
        %v486 = vperm.slane %v470, 0
        %v487 = vmul.f32 %v449, %v479
        %v488 = vmul.f32 %v450, %v480
        %v489 = vmul.f32 %v451, %v481
        %v490 = vmul.f32 %v452, %v482
        %v491 = vmul.f32 %v453, %v483
        %v492 = vmul.f32 %v454, %v484
        %v493 = vmul.f32 %v455, %v485
        %v494 = vmul.f32 %v456, %v486
        %vm495 = vcmask 1041408
        %v496 = vsel %vm495, %v487, 0.0
        %v497 = vsel %vm495, %v488, 0.0
        %v498 = vadd.f32 %v496, %v497
        %v499 = vsel %vm495, %v489, 0.0
        %v500 = vadd.f32 %v498, %v499
        %v501 = vsel %vm495, %v490, 0.0
        %v502 = vadd.f32 %v500, %v501
        %v503 = vsel %vm495, %v491, 0.0
        %v504 = vadd.f32 %v502, %v503
        %v505 = vsel %vm495, %v492, 0.0
        %v506 = vadd.f32 %v504, %v505
        %v507 = vsel %vm495, %v493, 0.0
        %v508 = vadd.f32 %v506, %v507
        %v509 = vsel %vm495, %v494, 0.0
        %v510 = vadd.f32 %v508, %v509
        %511 = vadd.xlane.f32.xlu0 %v510
        %v512 = vpop.xlane.xlu0 %511
        %v513 = vadd.f32 %v460, %v512
        %vm514 = vcmask 1024
        %515 = vst.msk [vmem:[#allocation2] sm:$0x3] %vm514, %v513
        // Predicated region
        $region41: #{qwen_vm_forward.1} parent=31 // pred_check
          %p516 = pneg %p234
        $region42: #{qwen_vm_forward.1} parent=31 // pred_check_branch
          %518 = sbr.rel (%p516) target = $region44
        $region43: #{qwen_vm_forward.1} parent=31 // pred_region
          %v519 = vld [vmem:[#allocation2] sm:$0x3]
          %520 = vst.msk [vmem:[%s232] sm:$0x3] %vm514, %v519
        $region44: #{qwen_vm_forward.1} parent=31 // pred_fallthru
          _
        %p521 = scmp.lt.s32.totalorder %s21, 1
        %s522 = scalar_select %p521, %s21, 1
        %s523 = smul.addr %s522, 2
        %s524 = scalar_lea.vmem %s3, %s523
        // Predicated region
        $region45: #{qwen_vm_forward.1} parent=31 // pred_check
          %p525 = pneg %p124
        $region46: #{qwen_vm_forward.1} parent=31 // pred_check_branch
          %527 = sbr.rel (%p525) target = $region48
        $region47: #{qwen_vm_forward.1} parent=31 // pred_region
          _
        $region48: #{qwen_vm_forward.1} parent=31 // pred_fallthru
          _
      $region32: #{qwen_vm_forward.1} parent=5 // pred_fallthru
        _
      %p528 = scmp.le.s32.totalorder 2, %s12
      // Predicated region
      $region49: #{qwen_vm_forward.1} parent=5 // pred_check
        %p529 = pneg %p528
      $region50: #{qwen_vm_forward.1} parent=5 // pred_check_branch
        %531 = sbr.rel (%p529) target = $region52
      $region51: #{qwen_vm_forward.1} parent=5 // pred_region
        %s532 = ssub.s32 %s12, 2
        // Predicated region
        $region53: #{qwen_vm_forward.1} parent=51 // pred_check
          %p533 = pneg %p130
        $region54: #{qwen_vm_forward.1} parent=51 // pred_check_branch
          %535 = sbr.rel (%p533) target = $region56
        $region55: #{qwen_vm_forward.1} parent=51 // pred_region
          %p536 = scmp.lt.s32.totalorder %s23, 1
          %s537 = scalar_select %p536, %s23, 1
          %s538 = smul.addr %s537, 2
          %s539 = scalar_lea.vmem %s3, %s538
        $region56: #{qwen_vm_forward.1} parent=51 // pred_fallthru
          _
      $region52: #{qwen_vm_forward.1} parent=5 // pred_fallthru
        _
    $region6: #{qwen_vm_forward.1} parent=1 // loop_footer
      %s16 = sadd.s32 1, %s12
    $region7: #{qwen_vm_forward.1} parent=1 // loop_footer_branch
      %11 = sbr.rel target = $region3
    $region8: #{qwen_vm_forward.1} parent=1 // loop_exit
      _
    %540 = vsyncpa [#allocation4], 1
    %s541 = scalar_lea.sflag [#allocation4], 1
    %542 = vsyncpa %s541, 1

</llo_original>
